<compile_context>
chip_gen: v6e
topology: v6e:2x2x1
jax: 0.10.0
libtpu: 0.0.40
codegen_flags: <defaults>
</compile_context>

<pallas_src>
import functools
import math

import jax
import jax.numpy as jnp
from jax import lax
from jax.experimental import pallas as pl
from jax.experimental.pallas import tpu as pltpu


def _seq_tile(S, preferred=512):
    """Largest divisor of S that is <= `preferred` and a multiple of 8.
    Falls back to full S only when no such divisor exists (tiny/odd S)."""
    for t in range(min(preferred, S), 7, -1):
        if S % t == 0 and t % 8 == 0:
            return t
    return S


def _vmem_limit_bytes():
    """Raise the scoped-VMEM ceiling above the 16/32 MiB default while leaving
    headroom under the physical capacity of the current chip (64 MiB on v7x)."""
    cap = 128 * 1024 * 1024
    try:
        cap = pltpu.get_tpu_info().vmem_capacity_bytes
    except Exception:  # non-TPU / interpret fallback: keep conservative default
        pass
    return int(min(96 * 1024 * 1024, (3 * cap) // 4))


# ---------------------------------------------------------------------------
# Kernel 1: fused K/V projection.  One (batch, seq-tile) grid step computes
# x_tile @ W_kv + b_kv for the fused [H, 2H] weight (already in compute dtype)
# and writes the k / v slices to two [B, S, H] outputs.
# ---------------------------------------------------------------------------
def kv_proj_kernel(x_ref, w_ref, b_ref, k_ref, v_ref, *, hidden):
    # x and w are already in compute dtype (pre-cast in the wrapper); bias is
    # a tiny f32 row so the add happens on the f32 accumulator.
    acc = jnp.dot(x_ref[0], w_ref[...],
                  preferred_element_type=jnp.float32)          # [tm, 2H] f32
    acc = acc + b_ref[...]                                     # + [1, 2H] f32
    k_ref[0] = acc[:, :hidden].astype(k_ref.dtype)
    v_ref[0] = acc[:, hidden:].astype(v_ref.dtype)


def kv_projection(x, w_kv, b_kv, *, out_dtype, vmem_limit):
    B, S, H = x.shape
    tm = _seq_tile(S)
    kernel = functools.partial(kv_proj_kernel, hidden=H)
    out_sd = jax.ShapeDtypeStruct((B, S, H), out_dtype)
    kv_block = pl.BlockSpec((1, tm, H), lambda b, i: (b, i, 0))
    return pl.pallas_call(
        kernel,
        out_shape=(out_sd, out_sd),
        grid_spec=pltpu.PrefetchScalarGridSpec(
            num_scalar_prefetch=0,
            grid=(B, S // tm),
            in_specs=[
                pl.BlockSpec((1, tm, H), lambda b, i: (b, i, 0)),   # x tile
                pl.BlockSpec((H, 2 * H), lambda b, i: (0, 0)),      # fused W_kv
                pl.BlockSpec((1, 2 * H), lambda b, i: (0, 0)),      # fused bias
            ],
            out_specs=[kv_block, kv_block],
        ),
        compiler_params=pltpu.CompilerParams(
            dimension_semantics=("parallel", "parallel"),
            vmem_limit_bytes=vmem_limit),
    )(x, w_kv, b_kv)


# ---------------------------------------------------------------------------
# Kernel 2: fused Q projection + attention.  One (batch, q-tile) grid step:
#   q_tile = x_tile @ W_q_scaled + b_q_scaled            (1/sqrt(D) pre-folded)
#   per head h (static lane slices of the [*, H] slabs):
#     scores = q_h . k_h^T + mask_row ; p = exp(scores - max)
#     ctx_h  = (p @ v_h) * reciprocal(sum(p))             (post-PV normalize)
#     o[:, h*D:(h+1)*D] = ctx_h                           (immediate store)
# Output is written as a lane-dense [tq, H] block, already in the final
# [B, S, all_head_size] layout -> no output transpose.
# ---------------------------------------------------------------------------
def attention_kernel(x_ref, wq_ref, bq_ref, k_ref, v_ref, mask_ref, o_ref, *,
                     num_heads, head_dim, compute_dtype, approx_recip):
    x = x_ref[0]                                           # [tq, H] compute dt
    # Fused q projection (W_q already scaled by 1/sqrt(D) and pre-cast).
    q = jnp.dot(x, wq_ref[...], preferred_element_type=jnp.float32)
    q = (q + bq_ref[...]).astype(compute_dtype)            # [tq, H]

    tq = q.shape[0]
    S = k_ref.shape[1]
    # Hoist the additive padding-row mask broadcast out of the head loop
    # (JAX does not CSE broadcast_in_dim).
    mask = jnp.broadcast_to(mask_ref[0].astype(jnp.float32), (tq, S))

    for h in range(num_heads):                             # static unroll
        sl = slice(h * head_dim, (h + 1) * head_dim)
        qh = q[:, sl]                                      # [tq, D]
        kh = k_ref[0, :, sl]                               # [S,  D] ref slice
        vh = v_ref[0, :, sl]                               # [S,  D] ref slice

        # Contract on D directly (no explicit k.T relayout): [tq, S] f32 acc.
        scores = lax.dot_general(qh, kh, (((1,), (1,)), ((), ())),
                                 preferred_element_type=jnp.float32)
        scores = scores + mask

        m = jnp.max(scores, axis=-1, keepdims=True)
        p = jnp.exp(scores - m)
        denom = jnp.sum(p, axis=-1, keepdims=True)

        # PV matmul on the UNNORMALIZED probabilities (values in [0, 1], f32
        # accumulation), then normalize the small [tq, D] context instead of
        # the [tq, S] probability tensor (S/D x fewer VALU multiplies).
        ctx = jnp.dot(p.astype(compute_dtype), vh,
                      preferred_element_type=jnp.float32)  # [tq, D] f32
        inv = pl.reciprocal(denom, approx=approx_recip)    # EUP slot when approx
        # Immediate per-head store -> bounded live ranges, no concat copies.
        o_ref[0, :, sl] = (ctx * inv).astype(o_ref.dtype)


def attention(x, w_q, b_q, k, v, mask_row, *, num_heads, compute_dtype,
              out_dtype, approx_recip, vmem_limit):
    B, S, H = x.shape
    D = H // num_heads
    tq = _seq_tile(S)
    kernel = functools.partial(attention_kernel, num_heads=num_heads,
                               head_dim=D, compute_dtype=compute_dtype,
                               approx_recip=approx_recip)
    return pl.pallas_call(
        kernel,
        out_shape=jax.ShapeDtypeStruct((B, S, H), out_dtype),
        grid_spec=pltpu.PrefetchScalarGridSpec(
            num_scalar_prefetch=0,
            grid=(B, S // tq),
            in_specs=[
                pl.BlockSpec((1, tq, H), lambda b, i: (b, i, 0)),   # x q-tile
                pl.BlockSpec((H, H), lambda b, i: (0, 0)),          # W_q scaled
                pl.BlockSpec((1, H), lambda b, i: (0, 0)),          # b_q scaled
                pl.BlockSpec((1, S, H), lambda b, i: (b, 0, 0)),    # full K
                pl.BlockSpec((1, S, H), lambda b, i: (b, 0, 0)),    # full V
                pl.BlockSpec((1, 1, S), lambda b, i: (b, 0, 0)),    # mask row
            ],
            out_specs=pl.BlockSpec((1, tq, H), lambda b, i: (b, i, 0)),
        ),
        compiler_params=pltpu.CompilerParams(
            dimension_semantics=("parallel", "parallel"),
            vmem_limit_bytes=vmem_limit),
    )(x, w_q, b_q, k, v, mask_row)


def _normalize_mask(attention_mask, B, S):
    """Accept the standard BERT additive padding mask ([B,1,1,S] / [B,1,S] /
    [B,S]) and return it as a [B, 1, S] f32 row."""
    m = jnp.asarray(attention_mask, jnp.float32)
    if m.size != B * S:
        raise ValueError(
            "attention_mask must be an additive padding-row mask broadcastable "
            "from [B,1,1,S]; full [B,1,S,S] masks are not supported here.")
    return m.reshape(B, 1, S)


# ---------------------------------------------------------------------------
# Module wrapper (matches the PyTorch SelfAttention forward semantics).
# ---------------------------------------------------------------------------
class SelfAttentionPallas:
    def __init__(self, hidden_size, num_attention_heads,
                 attention_probs_dropout_prob, key,
                 compute_dtype=jnp.bfloat16):
        if hidden_size % num_attention_heads != 0:
            raise ValueError("The hidden size (%d) is not a multiple of the "
                             "number of attention heads (%d)"
                             % (hidden_size, num_attention_heads))
        self.num_attention_heads = num_attention_heads
        self.attention_head_size = hidden_size // num_attention_heads
        self.all_head_size = hidden_size
        self.compute_dtype = compute_dtype
        # dropout: inference identity (attention_probs_dropout_prob ignored).

        kw, kb = jax.random.split(key)
        s = 1.0 / math.sqrt(hidden_size)
        H = hidden_size
        # Master f32 parameters (also used by the pure-JAX reference).
        # Fused [in, 3*out] layout so x @ W + b == torch's x @ weight.T + bias
        # for all three Linears.
        self.w_qkv_f32 = jax.random.uniform(kw, (H, 3 * H), jnp.float32, -s, s)
        self.b_qkv_f32 = jax.random.uniform(kb, (1, 3 * H), jnp.float32, -s, s)

        scale = 1.0 / math.sqrt(self.attention_head_size)
        # One-time: fold 1/sqrt(D) into W_q / b_q and pre-cast weights to the
        # compute dtype (halves weight DMA/VMEM in bf16 mode, no in-kernel
        # casts or per-head scaling at runtime).  Biases stay f32 (tiny rows,
        # added to the f32 accumulator).
        self.w_q = (self.w_qkv_f32[:, :H] * scale).astype(compute_dtype)
        self.b_q = self.b_qkv_f32[:, :H] * scale
        self.w_kv = self.w_qkv_f32[:, H:].astype(compute_dtype)
        self.b_kv = self.b_qkv_f32[:, H:]

    def __call__(self, hidden_states, attention_mask):
        B, S, H = hidden_states.shape
        vmem_limit = _vmem_limit_bytes()
        x = hidden_states.astype(self.compute_dtype)
        k, v = kv_projection(x, self.w_kv, self.b_kv,
                             out_dtype=self.compute_dtype,
                             vmem_limit=vmem_limit)
        mask_row = _normalize_mask(attention_mask, B, S)
        return attention(x, self.w_q, self.b_q, k, v, mask_row,
                         num_heads=self.num_attention_heads,
                         compute_dtype=self.compute_dtype,
                         out_dtype=hidden_states.dtype,
                         approx_recip=(self.compute_dtype != jnp.float32),
                         vmem_limit=vmem_limit)


# ---------------------------------------------------------------------------
# Pure-JAX reference (f32) for sanity checking.
# ---------------------------------------------------------------------------
def reference_forward(mod, hidden_states, attention_mask):
    B, S, H = hidden_states.shape
    nH, D = mod.num_attention_heads, mod.attention_head_size
    qkv = hidden_states @ mod.w_qkv_f32 + mod.b_qkv_f32
    q, k, v = qkv[..., :H], qkv[..., H:2 * H], qkv[..., 2 * H:]
    split = lambda x: x.reshape(B, S, nH, D).transpose(0, 2, 1, 3)
    q, k, v = split(q), split(k), split(v)
    mask = jnp.asarray(attention_mask, jnp.float32).reshape(B, 1, 1, S)
    scores = jnp.einsum("bhqd,bhkd->bhqk", q, k) / math.sqrt(D) + mask
    probs = jax.nn.softmax(scores, axis=-1)
    ctx = jnp.einsum("bhqk,bhkd->bhqd", probs, v)
    return ctx.transpose(0, 2, 1, 3).reshape(B, S, H)


if __name__ == "__main__":
    B, S, H, nH = 2, 8, 32, 4

    key = jax.random.PRNGKey(0)
    k_params, k_x, k_mask = jax.random.split(key, 3)

    hidden_states = jax.random.normal(k_x, (B, S, H), jnp.float32)
    # BERT-style additive padding mask: 0 for attended, -10000 for masked.
    keep = (jax.random.uniform(k_mask, (B, 1, 1, S)) > 0.2).astype(jnp.float32)
    attention_mask = (1.0 - keep) * -10000.0                   # [B, 1, 1, S]

    # f32 compute path: tight check vs the f32 reference (exact reciprocal).
    mod_f32 = SelfAttentionPallas(hidden_size=H, num_attention_heads=nH,
                                  attention_probs_dropout_prob=0.1,
                                  key=k_params, compute_dtype=jnp.float32)
    out_f32 = jax.block_until_ready(mod_f32(hidden_states, attention_mask))
    ref = reference_forward(mod_f32, hidden_states, attention_mask)
    assert out_f32.shape == (B, S, H)
    assert jnp.allclose(out_f32, ref, atol=5e-3, rtol=5e-3), \
        "f32 mismatch vs reference"

    # bf16 compute path (production fast path): loose check vs f32 reference.
    mod_bf16 = SelfAttentionPallas(hidden_size=H, num_attention_heads=nH,
                                   attention_probs_dropout_prob=0.1,
                                   key=k_params, compute_dtype=jnp.bfloat16)
    out_bf16 = jax.block_until_ready(mod_bf16(hidden_states, attention_mask))
    assert out_bf16.shape == (B, S, H)
    assert jnp.allclose(out_bf16.astype(jnp.float32), ref,
                        atol=1e-1, rtol=1e-1), "bf16 mismatch vs reference"

    print("KERNEL_OK")
</pallas_src>

<mosaic_0001>
module attributes {stable_mosaic.version = 11 : i64} {
  func.func @kv_proj_kernel(%arg0: i32, %arg1: i32, %arg2: memref<1x8x32xf32, #tpu.memory_space<vmem>>, %arg3: memref<32x64xf32, #tpu.memory_space<vmem>>, %arg4: memref<1x64xf32, #tpu.memory_space<vmem>>, %arg5: memref<1x8x32xf32, #tpu.memory_space<vmem>>, %arg6: memref<1x8x32xf32, #tpu.memory_space<vmem>>) attributes {dimension_semantics = [#tpu.dimension_semantics<parallel>, #tpu.dimension_semantics<parallel>], iteration_bounds = array<i64: 2, 1>, scalar_prefetch = 0 : i64, scratch_operands = 0 : i64, tpu.core_type = #tpu.core_type<tc>, window_params = [{transform_indices = @transform_0, window_bounds = array<i64: 1, 8, 32>}, {pipeline_mode = #tpu.pipeline_mode<synchronous>, transform_indices = @transform_1, window_bounds = array<i64: 32, 64>}, {pipeline_mode = #tpu.pipeline_mode<synchronous>, transform_indices = @transform_2, window_bounds = array<i64: 1, 64>}, {transform_indices = @transform_3, window_bounds = array<i64: 1, 8, 32>}, {transform_indices = @transform_4, window_bounds = array<i64: 1, 8, 32>}]} {
    %c0 = arith.constant 0 : index
    %c0_0 = arith.constant 0 : index
    %c0_1 = arith.constant 0 : index
    %0 = vector.load %arg2[%c0, %c0_0, %c0_1] : memref<1x8x32xf32, #tpu.memory_space<vmem>>, vector<1x8x32xf32>
    %1 = vector.shape_cast %0 : vector<1x8x32xf32> to vector<8x32xf32>
    %c0_2 = arith.constant 0 : index
    %c0_3 = arith.constant 0 : index
    %2 = vector.load %arg3[%c0_2, %c0_3] : memref<32x64xf32, #tpu.memory_space<vmem>>, vector<32x64xf32>
    %cst = arith.constant dense<0.000000e+00> : vector<8x64xf32>
    %3 = tpu.matmul %1, %2, %cst {dimension_numbers = #tpu.dot_dimension_numbers<[1], [0], [0], [1], [0, 0, 1, 1], [], []>} : vector<8x32xf32>, vector<32x64xf32>, vector<8x64xf32> -> vector<8x64xf32>
    %c0_4 = arith.constant 0 : index
    %c0_5 = arith.constant 0 : index
    %4 = vector.load %arg4[%c0_4, %c0_5] : memref<1x64xf32, #tpu.memory_space<vmem>>, vector<1x64xf32>
    %5 = vector.broadcast %4 : vector<1x64xf32> to vector<8x64xf32>
    %6 = arith.addf %3, %5 : vector<8x64xf32>
    %7 = vector.extract_strided_slice %6 {offsets = [0, 0], sizes = [8, 32], strides = [1, 1]} : vector<8x64xf32> to vector<8x32xf32>
    %c0_6 = arith.constant 0 : index
    %c0_7 = arith.constant 0 : index
    %c0_8 = arith.constant 0 : index
    %8 = vector.load %arg5[%c0_6, %c0_7, %c0_8] : memref<1x8x32xf32, #tpu.memory_space<vmem>>, vector<1x8x32xf32>
    %9 = vector.shape_cast %8 : vector<1x8x32xf32> to vector<8x32xf32>
    %10 = vector.shape_cast %7 : vector<8x32xf32> to vector<1x8x32xf32>
    tpu.vector_store %arg5[%c0_6, %c0_7, %c0_8], %10 {strides = array<i32>} : memref<1x8x32xf32, #tpu.memory_space<vmem>>, vector<1x8x32xf32>,
    %11 = vector.extract_strided_slice %6 {offsets = [0, 32], sizes = [8, 32], strides = [1, 1]} : vector<8x64xf32> to vector<8x32xf32>
    %c0_9 = arith.constant 0 : index
    %c0_10 = arith.constant 0 : index
    %c0_11 = arith.constant 0 : index
    %12 = vector.load %arg6[%c0_9, %c0_10, %c0_11] : memref<1x8x32xf32, #tpu.memory_space<vmem>>, vector<1x8x32xf32>
    %13 = vector.shape_cast %12 : vector<1x8x32xf32> to vector<8x32xf32>
    %14 = vector.shape_cast %11 : vector<8x32xf32> to vector<1x8x32xf32>
    tpu.vector_store %arg6[%c0_9, %c0_10, %c0_11], %14 {strides = array<i32>} : memref<1x8x32xf32, #tpu.memory_space<vmem>>, vector<1x8x32xf32>,
    return
  }
  func.func @transform_0(%arg0: i32, %arg1: i32) -> (i32, i32, i32) {
    %c0_i32 = arith.constant 0 : i32
    %c0_i32_0 = arith.constant 0 : i32
    return %arg0, %arg1, %c0_i32 : i32, i32, i32
  }
  func.func @transform_1(%arg0: i32, %arg1: i32) -> (i32, i32) {
    %c0_i32 = arith.constant 0 : i32
    %c0_i32_0 = arith.constant 0 : i32
    %c0_i32_1 = arith.constant 0 : i32
    return %c0_i32, %c0_i32_0 : i32, i32
  }
  func.func @transform_2(%arg0: i32, %arg1: i32) -> (i32, i32) {
    %c0_i32 = arith.constant 0 : i32
    %c0_i32_0 = arith.constant 0 : i32
    %c0_i32_1 = arith.constant 0 : i32
    return %c0_i32, %c0_i32_0 : i32, i32
  }
  func.func @transform_3(%arg0: i32, %arg1: i32) -> (i32, i32, i32) {
    %c0_i32 = arith.constant 0 : i32
    %c0_i32_0 = arith.constant 0 : i32
    return %arg0, %arg1, %c0_i32 : i32, i32, i32
  }
  func.func @transform_4(%arg0: i32, %arg1: i32) -> (i32, i32, i32) {
    %c0_i32 = arith.constant 0 : i32
    %c0_i32_0 = arith.constant 0 : i32
    return %arg0, %arg1, %c0_i32 : i32, i32, i32
  }
}

</mosaic_0001>

<llo_original>
// kernel: tpu_custom_call.1
$region0: #{tpu_custom_call.1}
  #allocation0 [shape = 'u32[]', space=smem, size = 0x4, offset = 0x4, fixed_abs, tag = 'smem constant byte address 0x4 - core index']
  #allocation1 [shape = 'u32[144,128]{1,0:T(1,128)}', space=vmem, size = 0x12000, scoped, tag = 'internal scratch']
  %s0 = inlined_call_operand.hbm [shape: f32[2,8,32], index: 0, kind: input, shape index: {}]
  %s1 = inlined_call_operand.hbm [shape: f32[32,64], index: 1, kind: input, shape index: {}]
  %s2 = inlined_call_operand.vmem [shape: f32[1,64], index: 2, kind: input, shape index: {}]
  %s3 = inlined_call_operand.hbm [shape: f32[2,8,32], index: 3, kind: output, shape index: {0}]
  %s4 = inlined_call_operand.hbm [shape: f32[2,8,32], index: 4, kind: output, shape index: {1}]
  %5 = xla_tuple %s3, %s4
  %s6 = sld [smem:[#allocation0]]
  $region61: #{tpu_custom_call.1} parent=0
    _
  %s8 = ssub.s32 1, %s6
  %s9 = scalar_select 0, %s8, %s6
  $region1: #{tpu_custom_call.1} parent=0
    #allocation2 [shape = 'u8[8192]{0}', space=vmem, size = 0x2000, scoped, tag = 'input window, operand 0']
    #allocation3 [shape = 's32[2]{0}', space=sflag, size = 0x8, scoped, tag = 'scoped memory for tpu_custom_call.1']
    #allocation4 [shape = 's32[2]{0}', space=sflag, size = 0x8, scoped, tag = 'scoped memory for tpu_custom_call.1']
    #allocation5 [shape = 'u8[16384]{0}', space=vmem, size = 0x4000, scoped, tag = 'input window, operand 1, single buffered']
    #allocation6 [shape = 's32[1]{0}', space=sflag, size = 0x4, scoped, tag = 'scoped memory for tpu_custom_call.1']
    #allocation7 [shape = 'u8[8192]{0}', space=vmem, size = 0x2000, scoped, tag = 'output window, operand 0']
    #allocation8 [shape = 'u8[8192]{0}', space=vmem, size = 0x2000, scoped, tag = 'output window, operand 1']
    #allocation9 [shape = 's32[2]{0}', space=sflag, size = 0x8, scoped, tag = 'scoped memory for tpu_custom_call.1']
    %10 = vsyncpa [#allocation3], 0
    %s11 = scalar_lea.sflag [#allocation3], 1
    %12 = vsyncpa %s11, 0
    %13 = vsyncpa [#allocation6], 0
    %14 = vsyncpa [#allocation4], 0
    %s15 = scalar_lea.sflag [#allocation4], 1
    %16 = vsyncpa %s15, 0
    %17 = vsyncpa [#allocation9], 0
    %s18 = scalar_lea.sflag [#allocation9], 1
    %19 = vsyncpa %s18, 0
    loop: start=0, step=1, limit=4
    $region2: #{tpu_custom_call.1} parent=1 // loop_pre_header
      _
    $region3: #{tpu_custom_call.1} parent=1 // loop_header
      %s21 = sphi 0, %s25
      %p22 = scmp.ge.s32.totalorder %s21, 4
      %s28 = sphi 0, %s40
      %s29 = sphi 0, %s36
      %s30 = sphi 0, %s28
      %s31 = sphi 0, %s29
      %s32 = sphi 0, %s30
      %s33 = sphi 0, %s31
      %s45 = sphi 0, %s47
      %s48 = sphi 0, %s45
      %s49 = sphi 0, %s48
      %s65 = sphi 0, %s49
      %s69 = sphi 0, %s69
      %s71 = sphi 0, %s69
      %s72 = sphi 0, %s71
      %s86 = sphi 0, %s72
      %s90 = sphi 0, %s90
      %s92 = sphi 0, %s90
      %s93 = sphi 0, %s92
      %s107 = sphi 0, %s93
      %s115 = sphi 0, %s117
      %s118 = sphi 0, %s115
      %s119 = sphi 0, %s118
      %s135 = sphi 0, %s119
      %s143 = sphi 0, %s145
      %s146 = sphi 0, %s143
      %s147 = sphi 0, %s146
      %s163 = sphi 0, %s147
    $region4: #{tpu_custom_call.1} parent=1 // loop_header_branch
      %24 = sbr.rel (%p22) target = $region8
    $region5: #{tpu_custom_call.1} parent=1 // loop_body
      %s26 = ssub.s32 %s21, 1
      %s27 = ssub.s32 %s21, 2
      %s34 = sadd.s32 1, %s29
      %p35 = scmp.ge.s32.totalorder %s34, 1
      %s36 = scalar_select %p35, 0, %s34
      %s37 = sadd.s32 1, %s28
      %s38 = scalar_select %p35, %s37, %s28
      %p39 = scmp.ge.s32.totalorder %s38, 2
      %s40 = scalar_select %p39, 0, %s38
      %s41 = ssub.s32 %s28, %s40
      %s42 = ssub.s32 %s29, %s36
      %s43 = sor.u32 %s41, %s42
      %p44 = scmp.eq.s32.totalorder %s43, 0
      %s46 = sadd.s32 %s45, 1
      %s47 = scalar_select %p44, %s45, %s46
      %p50 = pneg %p44
      %p51 = scmp.eq.s32.totalorder %s21, 1
      %p52 = por %p50, %p51
      %p53 = scmp.ne.s32.totalorder %s45, %s48
      %p54 = scmp.eq.s32.totalorder %s21, 0
      %p55 = por %p53, %p54
      %p56 = scmp.ne.s32.totalorder %s45, %s48
      %p57 = scmp.eq.s32.totalorder %s26, 1
      %p58 = por %p56, %p57
      %p59 = scmp.ne.s32.totalorder %s48, %s49
      %p60 = scmp.eq.s32.totalorder %s26, 0
      %p61 = por %p59, %p60
      %p62 = scmp.ne.s32.totalorder %s48, %s49
      %p63 = scmp.eq.s32.totalorder %s27, 1
      %p64 = por %p62, %p63
      %p66 = scmp.ne.s32.totalorder %s49, %s65
      %p67 = scmp.eq.s32.totalorder %s27, 0
      %p68 = por %p66, %p67
      %s70 = sadd.s32 %s69, 1
      %p73 = scmp.eq.s32.totalorder %s21, 1
      %p74 = scmp.ne.s32.totalorder %s69, %s71
      %p75 = scmp.eq.s32.totalorder %s21, 0
      %p76 = por %p74, %p75
      %p77 = scmp.ne.s32.totalorder %s69, %s71
      %p78 = scmp.eq.s32.totalorder %s26, 1
      %p79 = por %p77, %p78
      %p80 = scmp.ne.s32.totalorder %s71, %s72
      %p81 = scmp.eq.s32.totalorder %s26, 0
      %p82 = por %p80, %p81
      %p83 = scmp.ne.s32.totalorder %s71, %s72
      %p84 = scmp.eq.s32.totalorder %s27, 1
      %p85 = por %p83, %p84
      %p87 = scmp.ne.s32.totalorder %s72, %s86
      %p88 = scmp.eq.s32.totalorder %s27, 0
      %p89 = por %p87, %p88
      %s91 = sadd.s32 %s90, 1
      %p94 = scmp.eq.s32.totalorder %s21, 1
      %p95 = scmp.ne.s32.totalorder %s90, %s92
      %p96 = scmp.eq.s32.totalorder %s21, 0
      %p97 = por %p95, %p96
      %p98 = scmp.ne.s32.totalorder %s90, %s92
      %p99 = scmp.eq.s32.totalorder %s26, 1
      %p100 = por %p98, %p99
      %p101 = scmp.ne.s32.totalorder %s92, %s93
      %p102 = scmp.eq.s32.totalorder %s26, 0
      %p103 = por %p101, %p102
      %p104 = scmp.ne.s32.totalorder %s92, %s93
      %p105 = scmp.eq.s32.totalorder %s27, 1
      %p106 = por %p104, %p105
      %p108 = scmp.ne.s32.totalorder %s93, %s107
      %p109 = scmp.eq.s32.totalorder %s27, 0
      %p110 = por %p108, %p109
      %s111 = ssub.s32 %s28, %s40
      %s112 = ssub.s32 %s29, %s36
      %s113 = sor.u32 %s111, %s112
      %p114 = scmp.eq.s32.totalorder %s113, 0
      %s116 = sadd.s32 %s115, 1
      %s117 = scalar_select %p114, %s115, %s116
      %p120 = pneg %p114
      %p121 = scmp.eq.s32.totalorder %s21, 1
      %p122 = por %p120, %p121
      %p123 = scmp.ne.s32.totalorder %s115, %s118
      %p124 = scmp.eq.s32.totalorder %s21, 0
      %p125 = por %p123, %p124
      %p126 = scmp.ne.s32.totalorder %s115, %s118
      %p127 = scmp.eq.s32.totalorder %s26, 1
      %p128 = por %p126, %p127
      %p129 = scmp.ne.s32.totalorder %s118, %s119
      %p130 = scmp.eq.s32.totalorder %s26, 0
      %p131 = por %p129, %p130
      %p132 = scmp.ne.s32.totalorder %s118, %s119
      %p133 = scmp.eq.s32.totalorder %s27, 1
      %p134 = por %p132, %p133
      %p136 = scmp.ne.s32.totalorder %s119, %s135
      %p137 = scmp.eq.s32.totalorder %s27, 0
      %p138 = por %p136, %p137
      %s139 = ssub.s32 %s28, %s40
      %s140 = ssub.s32 %s29, %s36
      %s141 = sor.u32 %s139, %s140
      %p142 = scmp.eq.s32.totalorder %s141, 0
      %s144 = sadd.s32 %s143, 1
      %s145 = scalar_select %p142, %s143, %s144
      %p148 = pneg %p142
      %p149 = scmp.eq.s32.totalorder %s21, 1
      %p150 = por %p148, %p149
      %p151 = scmp.ne.s32.totalorder %s143, %s146
      %p152 = scmp.eq.s32.totalorder %s21, 0
      %p153 = por %p151, %p152
      %p154 = scmp.ne.s32.totalorder %s143, %s146
      %p155 = scmp.eq.s32.totalorder %s26, 1
      %p156 = por %p154, %p155
      %p157 = scmp.ne.s32.totalorder %s146, %s147
      %p158 = scmp.eq.s32.totalorder %s26, 0
      %p159 = por %p157, %p158
      %p160 = scmp.ne.s32.totalorder %s146, %s147
      %p161 = scmp.eq.s32.totalorder %s27, 1
      %p162 = por %p160, %p161
      %p164 = scmp.ne.s32.totalorder %s147, %s163
      %p165 = scmp.eq.s32.totalorder %s27, 0
      %p166 = por %p164, %p165
      %p167 = scmp.le.s32.totalorder 1, %s21
      %p168 = scmp.lt.s32.totalorder %s21, 3
      %p169 = pnand %p167, %p168
      %p170 = pneg %p169
      // Predicated region
      $region9: #{tpu_custom_call.1} parent=5 // pred_check
        _
      $region10: #{tpu_custom_call.1} parent=5 // pred_check_branch
        %172 = sbr.rel (%p169) target = $region12
      $region11: #{tpu_custom_call.1} parent=5 // pred_region
        %s173 = ssub.s32 %s21, 1
        // Predicated region
        $region13: #{tpu_custom_call.1} parent=11 // pred_check
          %p174 = pneg %p82
        $region14: #{tpu_custom_call.1} parent=11 // pred_check_branch
          %176 = sbr.rel (%p174) target = $region16
        $region15: #{tpu_custom_call.1} parent=11 // pred_region
          %s178 = ssub.s32 512, 512
          %179 = vsyncadd [#allocation6], %s178
          %s180 = sshll.u32 [#allocation5], 4
          %s181 = int_to_ptr.vmem [resolvable:$true] %s180
          %186 = dma.hbm_to_vmem [thread:$0]  %s1, 512, %s181, [#allocation6], 128, 128, 8
        $region16: #{tpu_custom_call.1} parent=11 // pred_fallthru
          _
        // Predicated region
        $region17: #{tpu_custom_call.1} parent=11 // pred_check
          %p187 = pneg %p103
        $region18: #{tpu_custom_call.1} parent=11 // pred_check_branch
          %189 = sbr.rel (%p187) target = $region20
        $region19: #{tpu_custom_call.1} parent=11 // pred_region
          _
        $region20: #{tpu_custom_call.1} parent=11 // pred_fallthru
          _
      $region12: #{tpu_custom_call.1} parent=5 // pred_fallthru
        _
      %p190 = scmp.lt.s32.totalorder %s21, 2
      // Predicated region
      $region21: #{tpu_custom_call.1} parent=5 // pred_check
        %p191 = pneg %p190
      $region22: #{tpu_custom_call.1} parent=5 // pred_check_branch
        %193 = sbr.rel (%p191) target = $region24
      $region23: #{tpu_custom_call.1} parent=5 // pred_region
        // Predicated region
        $region25: #{tpu_custom_call.1} parent=23 // pred_check
          %p194 = pneg %p55
        $region26: #{tpu_custom_call.1} parent=23 // pred_check_branch
          %196 = sbr.rel (%p194) target = $region28
        $region27: #{tpu_custom_call.1} parent=23 // pred_region
          %s197 = sand.u32 %s45, 1
          %s198 = scalar_lea.sflag [#allocation3], %s197
          %s199 = sand.u32 %s45, 1
          %s200 = smul.addr %s199, 8
          %s201 = scalar_lea.vmem [#allocation2], %s200
          %s203 = ssub.s32 128, 128
          %204 = vsyncadd %s198, %s203
          %s205 = sadd.s32 %s29, %s28
          %s206 = smul.addr %s205, 128
          %s207 = scalar_lea.hbm %s0, %s206
          %s209 = sshll.u32 %s201, 4
          %s210 = int_to_ptr.vmem [resolvable:$true] %s209
          %212 = dma.hbm_to_vmem [thread:$0]  %s207, 128, %s210, %s198
        $region28: #{tpu_custom_call.1} parent=23 // pred_fallthru
          _
      $region24: #{tpu_custom_call.1} parent=5 // pred_fallthru
        _
      %p213 = scmp.le.s32.totalorder 1, %s21
      %p214 = scmp.lt.s32.totalorder %s21, 3
      %p215 = pnand %p213, %p214
      %p216 = pneg %p215
      // Predicated region
      $region29: #{tpu_custom_call.1} parent=5 // pred_check
        _
      $region30: #{tpu_custom_call.1} parent=5 // pred_check_branch
        %218 = sbr.rel (%p215) target = $region32
      $region31: #{tpu_custom_call.1} parent=5 // pred_region
        %s219 = ssub.s32 %s21, 1
        %s220 = sand.u32 %s48, 1
        %s221 = scalar_lea.sflag [#allocation3], %s220
        %s222 = sand.u32 %s48, 1
        %s223 = smul.addr %s222, 8
        %s224 = scalar_lea.vmem [#allocation2], %s223
        // Predicated region
        $region33: #{tpu_custom_call.1} parent=31 // pred_check
          %p225 = pneg %p61
        $region34: #{tpu_custom_call.1} parent=31 // pred_check_branch
          %227 = sbr.rel (%p225) target = $region36
        $region35: #{tpu_custom_call.1} parent=31 // pred_region
          %228 = dma.done %s221, 128
        $region36: #{tpu_custom_call.1} parent=31 // pred_fallthru
          _
        // Predicated region
        $region37: #{tpu_custom_call.1} parent=31 // pred_check
          %p229 = pneg %p82
        $region38: #{tpu_custom_call.1} parent=31 // pred_check_branch
          %231 = sbr.rel (%p229) target = $region40
        $region39: #{tpu_custom_call.1} parent=31 // pred_region
          %232 = dma.done [#allocation6], 512
        $region40: #{tpu_custom_call.1} parent=31 // pred_fallthru
          _
        %s233 = sand.u32 %s48, 1
        %s234 = scalar_lea.sflag [#allocation3], %s233
        %s235 = sand.u32 %s48, 1
        %s236 = smul.addr %s235, 8
        %s237 = scalar_lea.vmem [#allocation2], %s236
        %p238 = pneg %p61
        %p239 = pneg %p58
        %p240 = pneg %p82
        %p241 = pneg %p79
        %p242 = pneg %p103
        %p243 = pneg %p100
        %p244 = pneg %p131
        %p245 = pneg %p128
        %s246 = sand.u32 %s118, 1
        %s247 = scalar_lea.sflag [#allocation4], %s246
        %s248 = sand.u32 %s118, 1
        %s249 = smul.addr %s248, 8
        %s250 = scalar_lea.vmem [#allocation7], %s249
        %p251 = pneg %p159
        %p252 = pneg %p156
        %s253 = sand.u32 %s146, 1
        %s254 = scalar_lea.sflag [#allocation9], %s253
        %s255 = sand.u32 %s146, 1
        %s256 = smul.addr %s255, 8
        %s257 = scalar_lea.vmem [#allocation8], %s256
        %v258 = vld [vmem:[%s224] sm:$0xff]
        %v259 = vld [vmem:[#allocation5] sm:$0xff]
        %v260 = vld [vmem:[#allocation5 + $0x8] sm:$0xff]
        %v261 = vld [vmem:[#allocation5 + $0x10] sm:$0xff]
        %v262 = vld [vmem:[#allocation5 + $0x18] sm:$0xff]
        %v263 = vld [vmem:[%s2] sm:$0x1]
        %v265 = vlaneseq
        %v266 = vshrl.u32 %v265, 7
        %v267 = vsub.s32 0, %v266
        %v268 = vrot.slane %v263, %v267
        %vm270 = vcmask 261120
        %v272 = vsel %vm270, %v258, 0
        %274 = vmatprep.subr.mxu0 0.0
        %275 = vmatpush1.msra.mxu0 0.0
        %276 = vmatprep.subr.mxu0 0.0
        %277 = vmatpush1.msra.mxu0 0.0
        %278 = vmatprep.subr.mxu0 0.0
        %279 = vmatpush1.msra.mxu0 0.0
        %280 = vmatprep.subr.mxu0 0.0
        %281 = vmatpush1.msra.mxu0 0.0
        %282 = vmatprep.subr.mxu0 0.0
        %283 = vmatpush1.msra.mxu0 0.0
        %284 = vmatprep.subr.mxu0 0.0
        %285 = vmatpush1.msra.mxu0 0.0
        %286 = vmatprep.subr.mxu0 0.0
        %287 = vmatpush1.msra.mxu0 0.0
        %288 = vmatprep.subr.mxu0 0.0
        %289 = vmatpush1.msra.mxu0 0.0
        %290 = vmatprep.subr.mxu0 0.0
        %291 = vmatpush1.msra.mxu0 0.0
        %292 = vmatprep.subr.mxu0 0.0
        %293 = vmatpush1.msra.mxu0 0.0
        %294 = vmatprep.subr.mxu0 0.0
        %295 = vmatpush1.msra.mxu0 0.0
        %296 = vmatprep.subr.mxu0 0.0
        %297 = vmatpush1.msra.mxu0 0.0
        %298 = vmatprep.subr.mxu0 0.0
        %299 = vmatpush1.msra.mxu0 %v262
        %300 = vmatprep.subr.mxu0 0.0
        %301 = vmatpush1.msra.mxu0 %v261
        %302 = vmatprep.subr.mxu0 0.0
        %303 = vmatpush1.msra.mxu0 %v260
        %304 = vmatprep.subr.mxu0 0.0
        %305 = vmatpush1.msra.mxu0 %v259
        %306 = vmatprep.subr.mxu0 0.0
        %307 = vmatpush2.msra.mxu0 0.0
        %308 = vmatprep.subr.mxu0 0.0
        %309 = vmatpush2.msra.mxu0 0.0
        %310 = vmatprep.subr.mxu0 0.0
        %311 = vmatpush2.msra.mxu0 0.0
        %312 = vmatprep.subr.mxu0 0.0
        %313 = vmatpush2.msra.mxu0 0.0
        %314 = vmatprep.subr.mxu0 0.0
        %315 = vmatpush2.msra.mxu0 0.0
        %316 = vmatprep.subr.mxu0 0.0
        %317 = vmatpush2.msra.mxu0 0.0
        %318 = vmatprep.subr.mxu0 0.0
        %319 = vmatpush2.msra.mxu0 0.0
        %320 = vmatprep.subr.mxu0 0.0
        %321 = vmatpush2.msra.mxu0 0.0
        %322 = vmatprep.subr.mxu0 0.0
        %323 = vmatpush2.msra.mxu0 0.0
        %324 = vmatprep.subr.mxu0 0.0
        %325 = vmatpush2.msra.mxu0 0.0
        %326 = vmatprep.subr.mxu0 0.0
        %327 = vmatpush2.msra.mxu0 0.0
        %328 = vmatprep.subr.mxu0 0.0
        %329 = vmatpush2.msra.mxu0 0.0
        %330 = vmatprep.subr.mxu0 0.0
        %331 = vmatpush2.msra.mxu0 0.0
        %332 = vmatprep.subr.mxu0 0.0
        %333 = vmatpush2.msra.mxu0 0.0
        %334 = vmatprep.subr.mxu0 0.0
        %335 = vmatpush2.msra.mxu0 0.0
        %336 = vmatprep.subr.mxu0 0.0
        %337 = vmatpush2.msra.mxu0 0.0
        %338 = vmatprep.mubr.f32.mxu0 0.0
        %339 = vmatmul.mubr.f32.gmra.mxu0 %v272
        %v340 = vpop.f32.mrf.mxu0
        %v341 = vadd.f32 %v268, %v340
        %v342 = vpop.f32.mrf.mxu0
        %343 = vdwg.mxu0
        %344 = vst.msk [vmem:[%s250] sm:$0xff] %vm270, %v341
        %346 = vrot.lane.b32.xlu0 %v341, 96
        %v347 = vpop.permute.xlu0 %346
        %349 = vst.msk [vmem:[%s257] sm:$0xff] %vm270, %v347
        %s350 = sand.u32 %s118, 1
        %s351 = scalar_lea.sflag [#allocation4], %s350
        %s352 = sand.u32 %s118, 1
        %s353 = smul.addr %s352, 8
        %s354 = scalar_lea.vmem [#allocation7], %s353
        %s355 = sand.u32 %s146, 1
        %s356 = scalar_lea.sflag [#allocation9], %s355
        %s357 = sand.u32 %s146, 1
        %s358 = smul.addr %s357, 8
        %s359 = scalar_lea.vmem [#allocation8], %s358
        // Predicated region
        $region41: #{tpu_custom_call.1} parent=31 // pred_check
          %p360 = pneg %p128
        $region42: #{tpu_custom_call.1} parent=31 // pred_check_branch
          %362 = sbr.rel (%p360) target = $region44
        $region43: #{tpu_custom_call.1} parent=31 // pred_region
          %s364 = ssub.s32 128, 128
          %365 = vsyncadd %s351, %s364
          %s366 = sadd.s32 %s31, %s30
          %s367 = smul.addr %s366, 128
          %s368 = scalar_lea.hbm %s3, %s367
          %s370 = sshll.u32 %s354, 4
          %s371 = int_to_ptr.vmem [resolvable:$true] %s370
          %373 = dma.vmem_to_hbm [thread:$0]  %s371, 128, %s368, %s351
        $region44: #{tpu_custom_call.1} parent=31 // pred_fallthru
          _
        // Predicated region
        $region45: #{tpu_custom_call.1} parent=31 // pred_check
          %p374 = pneg %p156
        $region46: #{tpu_custom_call.1} parent=31 // pred_check_branch
          %376 = sbr.rel (%p374) target = $region48
        $region47: #{tpu_custom_call.1} parent=31 // pred_region
          %s378 = ssub.s32 128, 128
          %379 = vsyncadd %s356, %s378
          %s380 = sadd.s32 %s31, %s30
          %s381 = smul.addr %s380, 128
          %s382 = scalar_lea.hbm %s4, %s381
          %s384 = sshll.u32 %s359, 4
          %s385 = int_to_ptr.vmem [resolvable:$true] %s384
          %387 = dma.vmem_to_hbm [thread:$0]  %s385, 128, %s382, %s356
        $region48: #{tpu_custom_call.1} parent=31 // pred_fallthru
          _
      $region32: #{tpu_custom_call.1} parent=5 // pred_fallthru
        _
      %p388 = scmp.le.s32.totalorder 2, %s21
      // Predicated region
      $region49: #{tpu_custom_call.1} parent=5 // pred_check
        %p389 = pneg %p388
      $region50: #{tpu_custom_call.1} parent=5 // pred_check_branch
        %391 = sbr.rel (%p389) target = $region52
      $region51: #{tpu_custom_call.1} parent=5 // pred_region
        %s392 = ssub.s32 %s21, 2
        // Predicated region
        $region53: #{tpu_custom_call.1} parent=51 // pred_check
          %p393 = pneg %p134
        $region54: #{tpu_custom_call.1} parent=51 // pred_check_branch
          %395 = sbr.rel (%p393) target = $region56
        $region55: #{tpu_custom_call.1} parent=51 // pred_region
          %s396 = sand.u32 %s119, 1
          %s397 = scalar_lea.sflag [#allocation4], %s396
          %s398 = sand.u32 %s119, 1
          %s399 = smul.addr %s398, 8
          %s400 = scalar_lea.vmem [#allocation7], %s399
          %401 = dma.done %s397, 128
        $region56: #{tpu_custom_call.1} parent=51 // pred_fallthru
          _
        // Predicated region
        $region57: #{tpu_custom_call.1} parent=51 // pred_check
          %p402 = pneg %p162
        $region58: #{tpu_custom_call.1} parent=51 // pred_check_branch
          %404 = sbr.rel (%p402) target = $region60
        $region59: #{tpu_custom_call.1} parent=51 // pred_region
          %s405 = sand.u32 %s147, 1
          %s406 = scalar_lea.sflag [#allocation9], %s405
          %s407 = sand.u32 %s147, 1
          %s408 = smul.addr %s407, 8
          %s409 = scalar_lea.vmem [#allocation8], %s408
          %410 = dma.done %s406, 128
        $region60: #{tpu_custom_call.1} parent=51 // pred_fallthru
          _
      $region52: #{tpu_custom_call.1} parent=5 // pred_fallthru
        _
    $region6: #{tpu_custom_call.1} parent=1 // loop_footer
      %s25 = sadd.s32 1, %s21
    $region7: #{tpu_custom_call.1} parent=1 // loop_footer_branch
      %20 = sbr.rel target = $region3
    $region8: #{tpu_custom_call.1} parent=1 // loop_exit
      _
    %411 = vsyncpa [#allocation3], 1
    %s412 = scalar_lea.sflag [#allocation3], 1
    %413 = vsyncpa %s412, 1
    %414 = vsyncpa [#allocation6], 1
    %415 = vsyncpa [#allocation4], 1
    %s416 = scalar_lea.sflag [#allocation4], 1
    %417 = vsyncpa %s416, 1
    %418 = vsyncpa [#allocation9], 1
    %s419 = scalar_lea.sflag [#allocation9], 1
    %420 = vsyncpa %s419, 1

</llo_original>
